<compile_context>
chip_gen: v5e
topology: v5e:2x2
jax: 0.10.0
libtpu: 0.0.40
codegen_flags: <defaults>
</compile_context>

<pallas_src>
import jax
import jax.numpy as jnp
from jax import lax
from jax.experimental import pallas as pl
from jax.experimental.pallas import tpu as pltpu

EPS = 1e-6
LANES = 128
SUBLANES = 8
CHUNK_ROWS = 512            # inner-loop chunk: (512, 128) f32 = 256 KiB per operand


def _round_up(a, b):
    return pl.cdiv(a, b) * b


def _tpu_config():
    """Pick (default_block_rows, num_cores) for the local TPU generation."""
    block_rows, num_cores = 4096, 1      # safe default: fits v5e's 16 MiB scoped VMEM
    try:
        kind = jax.devices()[0].device_kind.lower().replace(" ", "")
    except Exception:
        return block_rows, num_cores
    if "v6" in kind:
        block_rows = 8192                # 16 MiB double-buffered inputs < 32 MiB scoped default
    if "v7" in kind:
        block_rows, num_cores = 8192, 2  # 2 TensorCores per chip
    if "v4" in kind or "v5p" in kind:
        num_cores = 2                    # megacore chips
    return block_rows, num_cores


def _make_kernel(block_rows, chunk_rows, steps_per_core, valid_rows, mask_needed):
    n_chunks = block_rows // chunk_rows

    def kernel(x_ref, y_ref, o_ref):
        # o_ref: (8, 128) f32 partial-sum accumulator (one slice per core),
        # resident in VMEM across the inner ("arbitrary") grid axis.
        @pl.when(pl.program_id(1) == 0)
        def _():
            o_ref[...] = jnp.zeros_like(o_ref)

        # Global row offset of this grid step (used only for tail masking).
        block_row0 = (
            pl.program_id(0) * steps_per_core + pl.program_id(1)
        ) * block_rows

        def body(t, acc):
            r0 = pl.multiple_of(t * chunk_rows, chunk_rows)
            xs = x_ref[pl.ds(r0, chunk_rows), :].astype(jnp.float32)
            ys = y_ref[pl.ds(r0, chunk_rows), :].astype(jnp.float32)
            d = xs - ys
            e = jnp.sqrt(d * d + jnp.float32(EPS))
            if mask_needed:
                row_idx = (
                    block_row0
                    + r0
                    + lax.broadcasted_iota(jnp.int32, (chunk_rows, LANES), 0)
                )
                e = jnp.where(row_idx < valid_rows, e, 0.0)
            # (chunk_rows,128) -> (chunk_rows//8, 8, 128) summed on axis 0:
            # pure vreg-wise VPU adds into the (8,128) partial accumulator.
            return acc + e.reshape(-1, SUBLANES, LANES).sum(axis=0)

        acc = lax.fori_loop(
            0, n_chunks, body, jnp.zeros((SUBLANES, LANES), jnp.float32)
        )
        o_ref[...] += acc

    return kernel


def _charbonnier_main(xm, ym, rows, default_block_rows, num_cores):
    """Sum of sqrt((x-y)^2 + eps) over (rows, 128)-shaped operands via Pallas."""
    block_rows = max(16, min(default_block_rows,
                             _round_up(pl.cdiv(rows, num_cores), 16)))
    if block_rows >= CHUNK_ROWS:
        chunk_rows = CHUNK_ROWS
        block_rows = _round_up(block_rows, CHUNK_ROWS)
    else:
        chunk_rows = block_rows

    total_blocks = pl.cdiv(rows, block_rows)
    num_cores = max(1, min(num_cores, total_blocks))
    steps_per_core = pl.cdiv(total_blocks, num_cores)
    mask_needed = (num_cores * steps_per_core * block_rows) != rows
    last_block = total_blocks - 1

    # Phantom / partial trailing blocks are clamped onto the last valid block;
    # the in-kernel row mask zeroes every row >= `rows`, so no host-side padding
    # (and therefore no extra HBM read+write of the inputs) is ever performed.
    in_spec = pl.BlockSpec(
        (block_rows, LANES),
        lambda c, i: (jnp.minimum(c * steps_per_core + i, last_block), 0),
    )

    kernel = _make_kernel(block_rows, chunk_rows, steps_per_core, rows, mask_needed)

    cost = pl.CostEstimate(
        flops=5 * rows * LANES,
        transcendentals=rows * LANES,
        bytes_accessed=2 * rows * LANES * xm.dtype.itemsize
        + num_cores * SUBLANES * LANES * 4,
    )

    partials = pl.pallas_call(
        kernel,
        out_shape=jax.ShapeDtypeStruct((num_cores * SUBLANES, LANES), jnp.float32),
        grid=(num_cores, steps_per_core),
        in_specs=[in_spec, in_spec],
        out_specs=pl.BlockSpec((SUBLANES, LANES), lambda c, i: (c, 0)),
        compiler_params=pltpu.CompilerParams(
            # On v7x, verify via xprof that "parallel" shards this axis across
            # both TensorCores; if not, switch to pltpu.CORE_PARALLEL/core_map.
            dimension_semantics=("parallel", "arbitrary"),
        ),
        cost_estimate=cost,
    )(xm, ym)

    return jnp.sum(partials)


def l1_charbonnier_loss(x, y, block_rows=None, num_cores=None):
    """Pallas TPU implementation of L1_Charbonnier_loss.forward(X, Y)."""
    assert x.shape == y.shape
    n = int(x.size)
    if n == 0:
        return jnp.float32(0.0)

    cfg_rows, cfg_cores = _tpu_config()
    if block_rows is None:
        block_rows = cfg_rows
    if num_cores is None:
        num_cores = cfg_cores

    xf = x.reshape(-1)
    yf = y.reshape(-1)
    rows = n // LANES
    tail = n - rows * LANES

    total = jnp.float32(0.0)
    if rows > 0:
        if tail == 0:
            xm = xf.reshape(rows, LANES)      # contiguous reshape: no HBM copy
            ym = yf.reshape(rows, LANES)
        else:
            # numel not lane-aligned (rare for image tensors): run the kernel on
            # the lane-aligned prefix and fold the <128-element remainder below.
            xm = lax.slice(xf, (0,), (rows * LANES,)).reshape(rows, LANES)
            ym = lax.slice(yf, (0,), (rows * LANES,)).reshape(rows, LANES)
        total = total + _charbonnier_main(xm, ym, rows, block_rows, num_cores)

    if tail:
        xt = lax.slice(xf, (rows * LANES,), (n,)).astype(jnp.float32)
        yt = lax.slice(yf, (rows * LANES,), (n,)).astype(jnp.float32)
        dt = xt - yt
        total = total + jnp.sum(jnp.sqrt(dt * dt + jnp.float32(EPS)))

    return total


if __name__ == "__main__":
    key = jax.random.PRNGKey(0)
    kx, ky = jax.random.split(key)
    # NCHW inputs, like the PyTorch module expects
    X = jax.random.normal(kx, (2, 4, 16, 16), dtype=jnp.float32)
    Y = jax.random.normal(ky, (2, 4, 16, 16), dtype=jnp.float32)

    loss = jax.block_until_ready(l1_charbonnier_loss(X, Y))

    # reference in plain JAX
    ref = jnp.sum(jnp.sqrt((X - Y) * (X - Y) + EPS))
    assert jnp.allclose(loss, ref, rtol=1e-5, atol=1e-5), (loss, ref)

    print("KERNEL_OK")
</pallas_src>

<mosaic_0001>
module attributes {stable_mosaic.version = 11 : i64} {
  func.func @kernel(%arg0: i32, %arg1: i32, %arg2: memref<16x128xf32, #tpu.memory_space<vmem>>, %arg3: memref<16x128xf32, #tpu.memory_space<vmem>>, %arg4: memref<8x128xf32, #tpu.memory_space<vmem>>) attributes {dimension_semantics = [#tpu.dimension_semantics<parallel>, #tpu.dimension_semantics<arbitrary>], iteration_bounds = array<i64: 1, 1>, scalar_prefetch = 0 : i64, scratch_operands = 0 : i64, tpu.core_type = #tpu.core_type<tc>, window_params = [{transform_indices = @transform_0, window_bounds = array<i64: 16, 128>}, {transform_indices = @transform_1, window_bounds = array<i64: 16, 128>}, {transform_indices = @transform_2, window_bounds = array<i64: 8, 128>}]} {
    %c0_i32 = arith.constant 0 : i32
    %0 = arith.cmpi eq, %arg1, %c0_i32 : i32
    %1 = arith.extui %0 : i1 to i32
    %c0_i32_0 = arith.constant 0 : i32
    %2 = arith.cmpi ne, %1, %c0_i32_0 : i32
    scf.if %2 {
      %cst_9 = arith.constant 0.000000e+00 : f32
      %21 = vector.broadcast %cst_9 : f32 to vector<8x128xf32>
      %c0_10 = arith.constant 0 : index
      %c0_11 = arith.constant 0 : index
      %22 = vector.load %arg4[%c0_10, %c0_11] : memref<8x128xf32, #tpu.memory_space<vmem>>, vector<8x128xf32>
      tpu.vector_store %arg4[%c0_10, %c0_11], %21 {strides = array<i32>} : memref<8x128xf32, #tpu.memory_space<vmem>>, vector<8x128xf32>,
    } else {
    }
    %cst = arith.constant 0.000000e+00 : f32
    %3 = vector.broadcast %cst : f32 to vector<8x128xf32>
    %c0_i32_1 = arith.constant 0 : i32
    %c16_i32 = arith.constant 16 : i32
    %4 = arith.muli %c0_i32_1, %c16_i32 : i32
    %5 = tpu.assume_multiple %4, 16 : i32
    %6 = arith.index_cast %5 : i32 to index
    %c0 = arith.constant 0 : index
    %7 = vector.load %arg2[%6, %c0] : memref<16x128xf32, #tpu.memory_space<vmem>>, vector<16x128xf32>
    %8 = arith.index_cast %5 : i32 to index
    %c0_2 = arith.constant 0 : index
    %9 = vector.load %arg3[%8, %c0_2] : memref<16x128xf32, #tpu.memory_space<vmem>>, vector<16x128xf32>
    %10 = arith.subf %7, %9 : vector<16x128xf32>
    %11 = arith.mulf %10, %10 : vector<16x128xf32>
    %cst_3 = arith.constant 9.99999997E-7 : f32
    %12 = vector.broadcast %cst_3 : f32 to vector<16x128xf32>
    %13 = arith.addf %11, %12 : vector<16x128xf32>
    %14 = math.sqrt %13 : vector<16x128xf32>
    %15 = vector.shape_cast %14 : vector<16x128xf32> to vector<2x8x128xf32>
    %cst_4 = arith.constant dense<0.000000e+00> : vector<8x128xf32>
    %16 = vector.multi_reduction <add>, %15, %cst_4 [0] : vector<2x8x128xf32> to vector<8x128xf32>
    %17 = arith.addf %3, %16 : vector<8x128xf32>
    %c1_i32 = arith.constant 1 : i32
    %c0_5 = arith.constant 0 : index
    %c0_6 = arith.constant 0 : index
    %18 = vector.load %arg4[%c0_5, %c0_6] : memref<8x128xf32, #tpu.memory_space<vmem>>, vector<8x128xf32>
    %19 = arith.addf %18, %17 : vector<8x128xf32>
    %c0_7 = arith.constant 0 : index
    %c0_8 = arith.constant 0 : index
    %20 = vector.load %arg4[%c0_7, %c0_8] : memref<8x128xf32, #tpu.memory_space<vmem>>, vector<8x128xf32>
    tpu.vector_store %arg4[%c0_7, %c0_8], %19 {strides = array<i32>} : memref<8x128xf32, #tpu.memory_space<vmem>>, vector<8x128xf32>,
    return
  }
  func.func @transform_0(%arg0: i32, %arg1: i32) -> (i32, i32) {
    %c1_i32 = arith.constant 1 : i32
    %0 = arith.muli %arg0, %c1_i32 : i32
    %1 = arith.addi %0, %arg1 : i32
    %c0_i32 = arith.constant 0 : i32
    %2 = arith.minsi %1, %c0_i32 : i32
    %c0_i32_0 = arith.constant 0 : i32
    %c0_i32_1 = arith.constant 0 : i32
    return %2, %c0_i32_0 : i32, i32
  }
  func.func @transform_1(%arg0: i32, %arg1: i32) -> (i32, i32) {
    %c1_i32 = arith.constant 1 : i32
    %0 = arith.muli %arg0, %c1_i32 : i32
    %1 = arith.addi %0, %arg1 : i32
    %c0_i32 = arith.constant 0 : i32
    %2 = arith.minsi %1, %c0_i32 : i32
    %c0_i32_0 = arith.constant 0 : i32
    %c0_i32_1 = arith.constant 0 : i32
    return %2, %c0_i32_0 : i32, i32
  }
  func.func @transform_2(%arg0: i32, %arg1: i32) -> (i32, i32) {
    %c0_i32 = arith.constant 0 : i32
    %c0_i32_0 = arith.constant 0 : i32
    return %arg0, %c0_i32 : i32, i32
  }
}

</mosaic_0001>

<llo_original>
// kernel: tpu_custom_call.1
$region0: #{tpu_custom_call.1}
  #allocation0 [shape = 'u32[]', space=smem, size = 0x4, offset = 0x4, fixed_abs, tag = 'smem constant byte address 0x4 - core index']
  #allocation1 [shape = 'u32[72,128]{1,0:T(1,128)}', space=vmem, size = 0x9000, scoped, tag = 'internal scratch']
  %s0 = inlined_call_operand.hbm [shape: f32[16,128], index: 0, kind: input, shape index: {}]
  %s1 = inlined_call_operand.hbm [shape: f32[16,128], index: 1, kind: input, shape index: {}]
  %s2 = inlined_call_operand.hbm [shape: f32[8,128], index: 2, kind: output, shape index: {}]
  %s3 = sld [smem:[#allocation0]]
  $region30: #{tpu_custom_call.1} parent=0
    _
  %s5 = ssub.s32 1, %s3
  %s6 = scalar_select 0, %s5, %s3
  $region1: #{tpu_custom_call.1} parent=0
    #allocation2 [shape = 'u8[8192]{0}', space=vmem, size = 0x2000, scoped, tag = 'input window, operand 0, single buffered']
    #allocation3 [shape = 's32[1]{0}', space=sflag, size = 0x4, scoped, tag = 'scoped memory for tpu_custom_call.1']
    #allocation4 [shape = 's32[1]{0}', space=sflag, size = 0x4, scoped, tag = 'scoped memory for tpu_custom_call.1']
    #allocation5 [shape = 'u8[8192]{0}', space=vmem, size = 0x2000, scoped, tag = 'input window, operand 1, single buffered']
    #allocation6 [shape = 's32[1]{0}', space=sflag, size = 0x4, scoped, tag = 'scoped memory for tpu_custom_call.1']
    #allocation7 [shape = 'u8[4096]{0}', space=vmem, size = 0x1000, scoped, tag = 'output window, operand 0, single buffered']
    %7 = vsyncpa [#allocation3], 0
    %8 = vsyncpa [#allocation6], 0
    %9 = vsyncpa [#allocation4], 0
    // Predicated region
    $region2: #{tpu_custom_call.1} parent=1 // pred_check
      _
    $region3: #{tpu_custom_call.1} parent=1 // pred_check_branch
      %11 = sbr.rel (0) target = $region5
    $region4: #{tpu_custom_call.1} parent=1 // pred_region
      %s12 = sadd.s32 0, 0
      %p13 = scmp.lt.s32.totalorder %s12, 0
      %s14 = scalar_select %p13, %s12, 0
      %s15 = smul.u32 2, %s14
      %17 = vsyncadd [#allocation3], 0
      %s18 = smul.addr %s15, 8
      %s19 = scalar_lea.hbm %s0, %s18
      %s20 = sshll.u32 %s19, 4
      %s21 = int_to_ptr.hbm [resolvable:$true] %s20
      %s22 = sshll.u32 [#allocation2], 4
      %s23 = int_to_ptr.vmem [resolvable:$true] %s22
      %28 = dma.hbm_to_vmem [thread:$0]  %s21, 256, %s23, [#allocation3], 128, 128, 8
    $region5: #{tpu_custom_call.1} parent=1 // pred_fallthru
      _
    // Predicated region
    $region6: #{tpu_custom_call.1} parent=1 // pred_check
      _
    $region7: #{tpu_custom_call.1} parent=1 // pred_check_branch
      %30 = sbr.rel (0) target = $region9
    $region8: #{tpu_custom_call.1} parent=1 // pred_region
      %s31 = sadd.s32 0, 0
      %p32 = scmp.lt.s32.totalorder %s31, 0
      %s33 = scalar_select %p32, %s31, 0
      %s34 = smul.u32 2, %s33
      %36 = vsyncadd [#allocation6], 0
      %s37 = smul.addr %s34, 8
      %s38 = scalar_lea.hbm %s1, %s37
      %s39 = sshll.u32 %s38, 4
      %s40 = int_to_ptr.hbm [resolvable:$true] %s39
      %s41 = sshll.u32 [#allocation5], 4
      %s42 = int_to_ptr.vmem [resolvable:$true] %s41
      %47 = dma.hbm_to_vmem [thread:$0]  %s40, 256, %s42, [#allocation6], 128, 128, 8
    $region9: #{tpu_custom_call.1} parent=1 // pred_fallthru
      _
    // Predicated region
    $region10: #{tpu_custom_call.1} parent=1 // pred_check
      _
    $region11: #{tpu_custom_call.1} parent=1 // pred_check_branch
      %49 = sbr.rel (0) target = $region13
    $region12: #{tpu_custom_call.1} parent=1 // pred_region
      %51 = dma.done [#allocation3], 256
    $region13: #{tpu_custom_call.1} parent=1 // pred_fallthru
      _
    // Predicated region
    $region14: #{tpu_custom_call.1} parent=1 // pred_check
      _
    $region15: #{tpu_custom_call.1} parent=1 // pred_check_branch
      %53 = sbr.rel (0) target = $region17
    $region16: #{tpu_custom_call.1} parent=1 // pred_region
      %55 = dma.done [#allocation6], 256
    $region17: #{tpu_custom_call.1} parent=1 // pred_fallthru
      _
    %s56 = sadd.s32 0, 0
    %p57 = scmp.lt.s32.totalorder %s56, 0
    %s58 = scalar_select %p57, %s56, 0
    %s59 = smul.u32 2, %s58
    %s60 = sadd.s32 0, 0
    %p61 = scmp.lt.s32.totalorder %s60, 0
    %s62 = scalar_select %p61, %s60, 0
    %s63 = smul.u32 2, %s62
    %p64 = scmp.eq.s32.totalorder 0, 0
    // Predicated region
    $region18: #{tpu_custom_call.1} parent=1 // pred_check
      %p65 = pneg %p64
    $region19: #{tpu_custom_call.1} parent=1 // pred_check_branch
      %67 = sbr.rel (%p65) target = $region21
    $region20: #{tpu_custom_call.1} parent=1 // pred_region
      %68 = vst [vmem:[#allocation7] sm:$0xff] 0.0
    $region21: #{tpu_custom_call.1} parent=1 // pred_fallthru
      _
    %v69 = vld [vmem:[#allocation2] sm:$0xff]
    %v70 = vld [vmem:[#allocation2 + $0x8] sm:$0xff]
    %v71 = vld [vmem:[#allocation5] sm:$0xff]
    %v72 = vld [vmem:[#allocation5 + $0x8] sm:$0xff]
    %v73 = vsub.f32 %v69, %v71
    %v74 = vsub.f32 %v70, %v72
    %v75 = vmul.f32 %v73, %v73
    %v76 = vmul.f32 %v74, %v74
    %v77 = vadd.f32 %v75, 1e-06
    %v78 = vadd.f32 %v76, 1e-06
    %v79 = vrsqrt.pop %v77
    %v80 = vmul.f32 %v79, %v77
    %v81 = vmul.f32 %v80, %v79
    %v82 = vmul.f32 0.5, %v81
    %v83 = vsub.f32 1.5, %v82
    %v84 = vmul.f32 %v79, %v83
    %v85 = vmul.f32 %v77, %v84
    %vm86 = vcmp.eq.f32.partialorder %v77, inf
    %v87 = vsel %vm86, %v77, %v85
    %vm88 = vcmp.eq.f32.partialorder %v77, 0.0
    %v89 = vand.u32 %v77, 2147483648
    %v90 = vsel %vm88, %v89, %v87
    %v91 = vrsqrt.pop %v78
    %v92 = vmul.f32 %v91, %v78
    %v93 = vmul.f32 %v92, %v91
    %v94 = vmul.f32 0.5, %v93
    %v95 = vsub.f32 1.5, %v94
    %v96 = vmul.f32 %v91, %v95
    %v97 = vmul.f32 %v78, %v96
    %vm98 = vcmp.eq.f32.partialorder %v78, inf
    %v99 = vsel %vm98, %v78, %v97
    %vm100 = vcmp.eq.f32.partialorder %v78, 0.0
    %v101 = vand.u32 %v78, 2147483648
    %v102 = vsel %vm100, %v101, %v99
    %v103 = vadd.f32 %v90, %v102
    %v104 = vadd.f32 %v103, 0.0
    %v105 = vld [vmem:[#allocation7] sm:$0xff]
    %v106 = vadd.f32 %v105, %v104
    %107 = vst [vmem:[#allocation7] sm:$0xff] %v106
    // Predicated region
    $region22: #{tpu_custom_call.1} parent=1 // pred_check
      _
    $region23: #{tpu_custom_call.1} parent=1 // pred_check_branch
      %109 = sbr.rel (0) target = $region25
    $region24: #{tpu_custom_call.1} parent=1 // pred_region
      %111 = vsyncadd [#allocation4], 0
      %s113 = sshll.u32 [#allocation7], 4
      %s114 = int_to_ptr.vmem [resolvable:$true] %s113
      %s115 = sshll.u32 %s2, 4
      %s116 = int_to_ptr.hbm [resolvable:$true] %s115
      %118 = dma.vmem_to_hbm [thread:$0]  %s114, 128, %s116, [#allocation4]
    $region25: #{tpu_custom_call.1} parent=1 // pred_fallthru
      _
    // Predicated region
    $region26: #{tpu_custom_call.1} parent=1 // pred_check
      _
    $region27: #{tpu_custom_call.1} parent=1 // pred_check_branch
      %120 = sbr.rel (0) target = $region29
    $region28: #{tpu_custom_call.1} parent=1 // pred_region
      %122 = dma.done [#allocation4], 128
    $region29: #{tpu_custom_call.1} parent=1 // pred_fallthru
      _
    %123 = vsyncpa [#allocation3], 1
    %124 = vsyncpa [#allocation6], 1
    %125 = vsyncpa [#allocation4], 1

</llo_original>
